<compile_context>
chip_gen: v7x
topology: tpu7x:2x2x1
jax: 0.10.0
libtpu: 0.0.40
codegen_flags: <defaults>
</compile_context>

<pallas_src>
import functools

import jax
import jax.numpy as jnp
from jax.experimental import pallas as pl
from jax.experimental.pallas import tpu as pltpu

# Stand-ins for the argparse-driven hyperparameters in the original script.
RESNET_N = 1      # args.resnet_n (depth; see TODO below)
WIDEN_K = 2       # args.k (widening factor)
NOISE = 0.1       # args.noise
EPS = 1e-12       # guards rms==0 (all channels can be zero after ReLU)


def _round_up(x, m):
    return (x + m - 1) // m * m


# ----------------------------------------------------------------------------
# Fused kernel: (tm, K) @ (K, Cout) bf16 MXU matmul with f32 accumulation,
# + bias + ReLU + channel-RMS normalize + noisy copy, all in one epilogue.
# Weights/bias stay VMEM-resident across grid steps. No padded lanes anywhere.
# ----------------------------------------------------------------------------
def _fused_encoder_kernel(patches_ref, w_ref, b_ref, noise_ref,
                          z_ref, zn_ref, *, cout, noise_scale, eps):
    acc = jnp.dot(patches_ref[...], w_ref[...],
                  preferred_element_type=jnp.float32)         # MXU, f32 acc
    acc = jnp.maximum(acc + b_ref[...], 0.0)                  # bias + ReLU (f32)
    mean_sq = jnp.sum(acc * acc, axis=-1, keepdims=True) * (1.0 / cout)
    z = acc * jax.lax.rsqrt(mean_sq + eps)                    # rsqrt -> EUP slot
    z_ref[...] = z.astype(z_ref.dtype)                        # bf16 store
    zn = z + noise_scale * noise_ref[...].astype(jnp.float32)
    zn_ref[...] = zn.astype(zn_ref.dtype)                     # bf16 store


# ----------------------------------------------------------------------------
# im2col patch extraction (wrapper-side, NHWC, bf16 so the patch tensor that
# round-trips HBM is half the bytes of before and un-padded in K).
# TODO(synk): lib.ops.WideResnet(N=args.resnet_n, k=args.k) internals are not
# in the provided source; the encoder is represented by a single widened 3x3
# conv + ReLU stem producing z. Feature ordering of the patches must match the
# flatten order of any real imported PyTorch (Cout, Cin, 3, 3) weights.
# TODO(synk): largest remaining win is moving im2col into the kernel (DMA x
# tiles and build the 9 taps in VMEM) so the 9x-amplified patch tensor never
# round-trips HBM; kept wrapper-side here for robustness.
# ----------------------------------------------------------------------------
def _extract_patches(x_nchw):
    """(N, Cin, H, W) f32 -> (N*H*W, Cin*9) bf16 patches of a SAME 3x3 conv."""
    N, Cin, H, W = x_nchw.shape
    x_nhwc = jnp.transpose(x_nchw, (0, 2, 3, 1)).astype(jnp.bfloat16)
    patches = jax.lax.conv_general_dilated_patches(
        x_nhwc, filter_shape=(3, 3), window_strides=(1, 1), padding="SAME",
        dimension_numbers=("NHWC", "HWIO", "NHWC"))           # (N, H, W, Cin*9)
    return patches.reshape(N * H * W, Cin * 9)


def _draw_noise(key, m, cout):
    """bf16 noise for the real channels only (no padded f32 lanes in HBM)."""
    return jax.random.normal(key, (m, cout), dtype=jnp.bfloat16)


def encoder_forward(x_nchw, params, noise_key, *, tm=2048):
    """Pallas Encoder.forward. x: (N, Cin, H, W) f32 -> (z, z_noisy) in NCHW f32."""
    N, Cin, H, W = x_nchw.shape
    w, b = params["w"], params["b"]                  # (Cin*9, Cout), (1, Cout)
    K, Cout = w.shape
    M = N * H * W

    patches = _extract_patches(x_nchw)               # (M, K)    bf16
    noise = _draw_noise(noise_key, M, Cout)          # (M, Cout) bf16

    # Large row tile (HBM-bound kernel; per-row VMEM cost is ~0.5 KB double
    # buffered), capped near M/2 so the grid keeps >= 2 steps and the
    # ("parallel",) axis can load-balance v7x's two TensorCores.
    tm = max(8, min(tm, _round_up(pl.cdiv(M, 2), 8)))
    Mp = _round_up(M, tm)

    patches_p = jnp.pad(patches, ((0, Mp - M), (0, 0)))   # no-op when Mp == M
    noise_p = jnp.pad(noise, ((0, Mp - M), (0, 0)))
    w_bf = w.astype(jnp.bfloat16)                         # (K, Cout) resident
    b_f32 = b.astype(jnp.float32)                         # (1, Cout) resident

    kernel = functools.partial(_fused_encoder_kernel, cout=Cout,
                               noise_scale=NOISE, eps=EPS)

    z_flat, zn_flat = pl.pallas_call(
        kernel,
        out_shape=(jax.ShapeDtypeStruct((Mp, Cout), jnp.bfloat16),
                   jax.ShapeDtypeStruct((Mp, Cout), jnp.bfloat16)),
        grid=(Mp // tm,),
        in_specs=[
            pl.BlockSpec((tm, K), lambda i: (i, 0)),      # patches tile
            pl.BlockSpec((K, Cout), lambda i: (0, 0)),    # weights (resident)
            pl.BlockSpec((1, Cout), lambda i: (0, 0)),    # bias (resident)
            pl.BlockSpec((tm, Cout), lambda i: (i, 0)),   # noise tile
        ],
        out_specs=(pl.BlockSpec((tm, Cout), lambda i: (i, 0)),
                   pl.BlockSpec((tm, Cout), lambda i: (i, 0))),
        compiler_params=pltpu.CompilerParams(
            dimension_semantics=("parallel",)),           # megacore-shard (v7x)
    )(patches_p, w_bf, b_f32, noise_p)

    # Single slice + layout transpose + f32 upcast at the PyTorch API boundary.
    z = z_flat[:M].reshape(N, H, W, Cout).transpose(0, 3, 1, 2).astype(jnp.float32)
    zn = zn_flat[:M].reshape(N, H, W, Cout).transpose(0, 3, 1, 2).astype(jnp.float32)
    return z, zn


if __name__ == "__main__":
    key = jax.random.PRNGKey(0)
    kx, kw, kb, kn = jax.random.split(key, 4)

    # CIFAR-like input at small shapes: N=2, Cin=3, H=W=16.
    N, Cin, H, W = 2, 3, 16, 16
    Cout = 16 * WIDEN_K   # widened stem channels = 32

    x = jax.random.normal(kx, (N, Cin, H, W), dtype=jnp.float32)
    params = {
        "w": 0.1 * jax.random.normal(kw, (Cin * 9, Cout), dtype=jnp.float32),
        "b": 0.01 * jax.random.normal(kb, (1, Cout), dtype=jnp.float32),
    }

    z, z_noisy = encoder_forward(x, params, kn)
    jax.block_until_ready((z, z_noisy))

    # Pure-JAX reference using the exact same bf16 patches / bf16 noise the
    # kernel consumes (bf16 matmul inputs, f32 accumulation).
    patches_f32 = _extract_patches(x).astype(jnp.float32)
    w_bf = params["w"].astype(jnp.bfloat16).astype(jnp.float32)
    feat = jnp.maximum(patches_f32 @ w_bf + params["b"], 0.0)
    z_ref_flat = feat * jax.lax.rsqrt(
        jnp.mean(feat ** 2, axis=-1, keepdims=True) + EPS)
    noise_ref = _draw_noise(kn, N * H * W, Cout).astype(jnp.float32)
    zn_ref_flat = z_ref_flat + NOISE * noise_ref
    z_ref = z_ref_flat.reshape(N, H, W, Cout).transpose(0, 3, 1, 2)
    zn_ref = zn_ref_flat.reshape(N, H, W, Cout).transpose(0, 3, 1, 2)

    assert z.shape == (N, Cout, H, W) and z_noisy.shape == (N, Cout, H, W)
    # Outputs are stored in bf16 -> compare at bf16-quantization tolerance.
    assert jnp.allclose(z, z_ref, atol=1e-2, rtol=1e-2)
    assert jnp.allclose(z_noisy, zn_ref, atol=1e-2, rtol=1e-2)
    assert bool(jnp.all(jnp.isfinite(z_noisy)))

    print("KERNEL_OK")
</pallas_src>

<mosaic_0001>
module attributes {stable_mosaic.version = 11 : i64} {
  func.func @_fused_encoder_kernel(%arg0: i32, %arg1: memref<256x27xbf16, #tpu.memory_space<vmem>>, %arg2: memref<27x32xbf16, #tpu.memory_space<vmem>>, %arg3: memref<1x32xf32, #tpu.memory_space<vmem>>, %arg4: memref<256x32xbf16, #tpu.memory_space<vmem>>, %arg5: memref<256x32xbf16, #tpu.memory_space<vmem>>, %arg6: memref<256x32xbf16, #tpu.memory_space<vmem>>) attributes {dimension_semantics = [#tpu.dimension_semantics<parallel>], iteration_bounds = array<i64: 2>, scalar_prefetch = 0 : i64, scratch_operands = 0 : i64, tpu.core_type = #tpu.core_type<tc>, window_params = [{transform_indices = @transform_0, window_bounds = array<i64: 256, 27>}, {pipeline_mode = #tpu.pipeline_mode<synchronous>, transform_indices = @transform_1, window_bounds = array<i64: 27, 32>}, {pipeline_mode = #tpu.pipeline_mode<synchronous>, transform_indices = @transform_2, window_bounds = array<i64: 1, 32>}, {transform_indices = @transform_3, window_bounds = array<i64: 256, 32>}, {transform_indices = @transform_4, window_bounds = array<i64: 256, 32>}, {transform_indices = @transform_5, window_bounds = array<i64: 256, 32>}]} {
    %c0 = arith.constant 0 : index
    %c0_0 = arith.constant 0 : index
    %0 = vector.load %arg1[%c0, %c0_0] : memref<256x27xbf16, #tpu.memory_space<vmem>>, vector<256x27xbf16>
    %c0_1 = arith.constant 0 : index
    %c0_2 = arith.constant 0 : index
    %1 = vector.load %arg2[%c0_1, %c0_2] : memref<27x32xbf16, #tpu.memory_space<vmem>>, vector<27x32xbf16>
    %cst = arith.constant dense<0.000000e+00> : vector<256x32xf32>
    %2 = tpu.matmul %0, %1, %cst {dimension_numbers = #tpu.dot_dimension_numbers<[1], [0], [0], [1], [0, 0, 1, 1], [], []>} : vector<256x27xbf16>, vector<27x32xbf16>, vector<256x32xf32> -> vector<256x32xf32>
    %c0_3 = arith.constant 0 : index
    %c0_4 = arith.constant 0 : index
    %3 = vector.load %arg3[%c0_3, %c0_4] : memref<1x32xf32, #tpu.memory_space<vmem>>, vector<1x32xf32>
    %4 = vector.broadcast %3 : vector<1x32xf32> to vector<256x32xf32>
    %5 = arith.addf %2, %4 : vector<256x32xf32>
    %cst_5 = arith.constant 0.000000e+00 : f32
    %6 = vector.broadcast %cst_5 : f32 to vector<256x32xf32>
    %7 = arith.maximumf %5, %6 : vector<256x32xf32>
    %8 = arith.mulf %7, %7 : vector<256x32xf32>
    %cst_6 = arith.constant dense<0.000000e+00> : vector<256xf32>
    %9 = vector.multi_reduction <add>, %8, %cst_6 [1] : vector<256x32xf32> to vector<256xf32>
    %10 = vector.shape_cast %9 : vector<256xf32> to vector<256x1xf32>
    %cst_7 = arith.constant 3.125000e-02 : f32
    %11 = vector.broadcast %cst_7 : f32 to vector<256x1xf32>
    %12 = arith.mulf %10, %11 : vector<256x1xf32>
    %cst_8 = arith.constant 9.99999996E-13 : f32
    %13 = vector.broadcast %cst_8 : f32 to vector<256x1xf32>
    %14 = arith.addf %12, %13 : vector<256x1xf32>
    %15 = math.rsqrt %14 : vector<256x1xf32>
    %16 = vector.broadcast %15 : vector<256x1xf32> to vector<256x32xf32>
    %17 = arith.mulf %7, %16 : vector<256x32xf32>
    %18 = arith.truncf %17 : vector<256x32xf32> to vector<256x32xbf16>
    %c0_9 = arith.constant 0 : index
    %c0_10 = arith.constant 0 : index
    %19 = vector.load %arg5[%c0_9, %c0_10] : memref<256x32xbf16, #tpu.memory_space<vmem>>, vector<256x32xbf16>
    tpu.vector_store %arg5[%c0_9, %c0_10], %18 {strides = array<i32>} : memref<256x32xbf16, #tpu.memory_space<vmem>>, vector<256x32xbf16>,
    %c0_11 = arith.constant 0 : index
    %c0_12 = arith.constant 0 : index
    %20 = vector.load %arg4[%c0_11, %c0_12] : memref<256x32xbf16, #tpu.memory_space<vmem>>, vector<256x32xbf16>
    %21 = arith.extf %20 : vector<256x32xbf16> to vector<256x32xf32>
    %cst_13 = arith.constant 1.000000e-01 : f32
    %22 = vector.broadcast %cst_13 : f32 to vector<256x32xf32>
    %23 = arith.mulf %22, %21 : vector<256x32xf32>
    %24 = arith.addf %17, %23 : vector<256x32xf32>
    %25 = arith.truncf %24 : vector<256x32xf32> to vector<256x32xbf16>
    %c0_14 = arith.constant 0 : index
    %c0_15 = arith.constant 0 : index
    %26 = vector.load %arg6[%c0_14, %c0_15] : memref<256x32xbf16, #tpu.memory_space<vmem>>, vector<256x32xbf16>
    tpu.vector_store %arg6[%c0_14, %c0_15], %25 {strides = array<i32>} : memref<256x32xbf16, #tpu.memory_space<vmem>>, vector<256x32xbf16>,
    return
  }
  func.func @transform_0(%arg0: i32) -> (i32, i32) {
    %c0_i32 = arith.constant 0 : i32
    %c0_i32_0 = arith.constant 0 : i32
    return %arg0, %c0_i32 : i32, i32
  }
  func.func @transform_1(%arg0: i32) -> (i32, i32) {
    %c0_i32 = arith.constant 0 : i32
    %c0_i32_0 = arith.constant 0 : i32
    %c0_i32_1 = arith.constant 0 : i32
    return %c0_i32, %c0_i32_0 : i32, i32
  }
  func.func @transform_2(%arg0: i32) -> (i32, i32) {
    %c0_i32 = arith.constant 0 : i32
    %c0_i32_0 = arith.constant 0 : i32
    %c0_i32_1 = arith.constant 0 : i32
    return %c0_i32, %c0_i32_0 : i32, i32
  }
  func.func @transform_3(%arg0: i32) -> (i32, i32) {
    %c0_i32 = arith.constant 0 : i32
    %c0_i32_0 = arith.constant 0 : i32
    return %arg0, %c0_i32 : i32, i32
  }
  func.func @transform_4(%arg0: i32) -> (i32, i32) {
    %c0_i32 = arith.constant 0 : i32
    %c0_i32_0 = arith.constant 0 : i32
    return %arg0, %c0_i32 : i32, i32
  }
  func.func @transform_5(%arg0: i32) -> (i32, i32) {
    %c0_i32 = arith.constant 0 : i32
    %c0_i32_0 = arith.constant 0 : i32
    return %arg0, %c0_i32 : i32, i32
  }
}

</mosaic_0001>

<llo_original>
// kernel: tpu_custom_call.1
$region0: #{tpu_custom_call.1}
  #allocation0 [shape = 'u32[]', space=smem, size = 0x4, offset = 0x4, fixed_abs, tag = 'smem constant byte address 0x4 - core index']
  #allocation1 [shape = 'u32[144,128]{1,0:T(1,128)}', space=vmem, size = 0x12000, scoped, tag = 'internal scratch']
  %s0 = inlined_call_operand.vmem [shape: bf16[512,27], index: 0, kind: input, shape index: {}]
  %s1 = inlined_call_operand.vmem [shape: bf16[27,32], index: 1, kind: input, shape index: {}]
  %s2 = inlined_call_operand.vmem [shape: f32[1,32], index: 2, kind: input, shape index: {}]
  %s3 = inlined_call_operand.vmem [shape: bf16[512,32], index: 3, kind: input, shape index: {}]
  %s4 = inlined_call_operand.vmem [shape: bf16[512,32], index: 4, kind: output, shape index: {0}]
  %s5 = inlined_call_operand.vmem [shape: bf16[512,32], index: 5, kind: output, shape index: {1}]
  %6 = xla_tuple %s4, %s5
  %s7 = sld [smem:[#allocation0]]
  $region57: #{tpu_custom_call.1} parent=0
    _
  %s9 = ssub.s32 1, %s7
  %s10 = scalar_select 0, %s9, %s7
  loop: start=0, step=1, limit=4
  $region2: #{tpu_custom_call.1} parent=0 // loop_pre_header
    _
  $region3: #{tpu_custom_call.1} parent=0 // loop_header
    %s12 = sphi 0, %s16
    %p13 = scmp.ge.s32.totalorder %s12, 4
    %s22 = sphi 0, %s24
    %s25 = sphi 0, %s22
    %s26 = sphi 0, %s25
    %s42 = sphi 0, %s26
    %s46 = sphi 0, %s46
    %s48 = sphi 0, %s46
    %s49 = sphi 0, %s48
    %s63 = sphi 0, %s49
    %s67 = sphi 0, %s67
    %s69 = sphi 0, %s67
    %s70 = sphi 0, %s69
    %s84 = sphi 0, %s70
    %s90 = sphi 0, %s92
    %s93 = sphi 0, %s90
    %s94 = sphi 0, %s93
    %s110 = sphi 0, %s94
    %s116 = sphi 0, %s118
    %s119 = sphi 0, %s116
    %s120 = sphi 0, %s119
    %s136 = sphi 0, %s120
    %s142 = sphi 0, %s144
    %s145 = sphi 0, %s142
    %s146 = sphi 0, %s145
    %s162 = sphi 0, %s146
  $region4: #{tpu_custom_call.1} parent=0 // loop_header_branch
    %15 = sbr.rel (%p13) target = $region8
  $region5: #{tpu_custom_call.1} parent=0 // loop_body
    %s17 = ssub.s32 %s12, 1
    %s18 = ssub.s32 %s12, 2
    %s19 = sadd.s32 %s12, 1
    %s20 = ssub.s32 %s12, %s19
    %p21 = scmp.eq.s32.totalorder %s20, 0
    %s23 = sadd.s32 %s22, 1
    %s24 = scalar_select %p21, %s22, %s23
    %p27 = pneg %p21
    %p28 = scmp.eq.s32.totalorder %s12, 1
    %p29 = por %p27, %p28
    %p30 = scmp.ne.s32.totalorder %s22, %s25
    %p31 = scmp.eq.s32.totalorder %s12, 0
    %p32 = por %p30, %p31
    %p33 = scmp.ne.s32.totalorder %s22, %s25
    %p34 = scmp.eq.s32.totalorder %s17, 1
    %p35 = por %p33, %p34
    %p36 = scmp.ne.s32.totalorder %s25, %s26
    %p37 = scmp.eq.s32.totalorder %s17, 0
    %p38 = por %p36, %p37
    %p39 = scmp.ne.s32.totalorder %s25, %s26
    %p40 = scmp.eq.s32.totalorder %s18, 1
    %p41 = por %p39, %p40
    %p43 = scmp.ne.s32.totalorder %s26, %s42
    %p44 = scmp.eq.s32.totalorder %s18, 0
    %p45 = por %p43, %p44
    %s47 = sadd.s32 %s46, 1
    %p50 = scmp.eq.s32.totalorder %s12, 1
    %p51 = scmp.ne.s32.totalorder %s46, %s48
    %p52 = scmp.eq.s32.totalorder %s12, 0
    %p53 = por %p51, %p52
    %p54 = scmp.ne.s32.totalorder %s46, %s48
    %p55 = scmp.eq.s32.totalorder %s17, 1
    %p56 = por %p54, %p55
    %p57 = scmp.ne.s32.totalorder %s48, %s49
    %p58 = scmp.eq.s32.totalorder %s17, 0
    %p59 = por %p57, %p58
    %p60 = scmp.ne.s32.totalorder %s48, %s49
    %p61 = scmp.eq.s32.totalorder %s18, 1
    %p62 = por %p60, %p61
    %p64 = scmp.ne.s32.totalorder %s49, %s63
    %p65 = scmp.eq.s32.totalorder %s18, 0
    %p66 = por %p64, %p65
    %s68 = sadd.s32 %s67, 1
    %p71 = scmp.eq.s32.totalorder %s12, 1
    %p72 = scmp.ne.s32.totalorder %s67, %s69
    %p73 = scmp.eq.s32.totalorder %s12, 0
    %p74 = por %p72, %p73
    %p75 = scmp.ne.s32.totalorder %s67, %s69
    %p76 = scmp.eq.s32.totalorder %s17, 1
    %p77 = por %p75, %p76
    %p78 = scmp.ne.s32.totalorder %s69, %s70
    %p79 = scmp.eq.s32.totalorder %s17, 0
    %p80 = por %p78, %p79
    %p81 = scmp.ne.s32.totalorder %s69, %s70
    %p82 = scmp.eq.s32.totalorder %s18, 1
    %p83 = por %p81, %p82
    %p85 = scmp.ne.s32.totalorder %s70, %s84
    %p86 = scmp.eq.s32.totalorder %s18, 0
    %p87 = por %p85, %p86
    %s88 = ssub.s32 %s12, %s19
    %p89 = scmp.eq.s32.totalorder %s88, 0
    %s91 = sadd.s32 %s90, 1
    %s92 = scalar_select %p89, %s90, %s91
    %p95 = pneg %p89
    %p96 = scmp.eq.s32.totalorder %s12, 1
    %p97 = por %p95, %p96
    %p98 = scmp.ne.s32.totalorder %s90, %s93
    %p99 = scmp.eq.s32.totalorder %s12, 0
    %p100 = por %p98, %p99
    %p101 = scmp.ne.s32.totalorder %s90, %s93
    %p102 = scmp.eq.s32.totalorder %s17, 1
    %p103 = por %p101, %p102
    %p104 = scmp.ne.s32.totalorder %s93, %s94
    %p105 = scmp.eq.s32.totalorder %s17, 0
    %p106 = por %p104, %p105
    %p107 = scmp.ne.s32.totalorder %s93, %s94
    %p108 = scmp.eq.s32.totalorder %s18, 1
    %p109 = por %p107, %p108
    %p111 = scmp.ne.s32.totalorder %s94, %s110
    %p112 = scmp.eq.s32.totalorder %s18, 0
    %p113 = por %p111, %p112
    %s114 = ssub.s32 %s12, %s19
    %p115 = scmp.eq.s32.totalorder %s114, 0
    %s117 = sadd.s32 %s116, 1
    %s118 = scalar_select %p115, %s116, %s117
    %p121 = pneg %p115
    %p122 = scmp.eq.s32.totalorder %s12, 1
    %p123 = por %p121, %p122
    %p124 = scmp.ne.s32.totalorder %s116, %s119
    %p125 = scmp.eq.s32.totalorder %s12, 0
    %p126 = por %p124, %p125
    %p127 = scmp.ne.s32.totalorder %s116, %s119
    %p128 = scmp.eq.s32.totalorder %s17, 1
    %p129 = por %p127, %p128
    %p130 = scmp.ne.s32.totalorder %s119, %s120
    %p131 = scmp.eq.s32.totalorder %s17, 0
    %p132 = por %p130, %p131
    %p133 = scmp.ne.s32.totalorder %s119, %s120
    %p134 = scmp.eq.s32.totalorder %s18, 1
    %p135 = por %p133, %p134
    %p137 = scmp.ne.s32.totalorder %s120, %s136
    %p138 = scmp.eq.s32.totalorder %s18, 0
    %p139 = por %p137, %p138
    %s140 = ssub.s32 %s12, %s19
    %p141 = scmp.eq.s32.totalorder %s140, 0
    %s143 = sadd.s32 %s142, 1
    %s144 = scalar_select %p141, %s142, %s143
    %p147 = pneg %p141
    %p148 = scmp.eq.s32.totalorder %s12, 1
    %p149 = por %p147, %p148
    %p150 = scmp.ne.s32.totalorder %s142, %s145
    %p151 = scmp.eq.s32.totalorder %s12, 0
    %p152 = por %p150, %p151
    %p153 = scmp.ne.s32.totalorder %s142, %s145
    %p154 = scmp.eq.s32.totalorder %s17, 1
    %p155 = por %p153, %p154
    %p156 = scmp.ne.s32.totalorder %s145, %s146
    %p157 = scmp.eq.s32.totalorder %s17, 0
    %p158 = por %p156, %p157
    %p159 = scmp.ne.s32.totalorder %s145, %s146
    %p160 = scmp.eq.s32.totalorder %s18, 1
    %p161 = por %p159, %p160
    %p163 = scmp.ne.s32.totalorder %s146, %s162
    %p164 = scmp.eq.s32.totalorder %s18, 0
    %p165 = por %p163, %p164
    %p166 = scmp.le.s32.totalorder 1, %s12
    %p167 = scmp.lt.s32.totalorder %s12, 3
    %p168 = pnand %p166, %p167
    %p169 = pneg %p168
    // Predicated region
    $region9: #{tpu_custom_call.1} parent=5 // pred_check
      _
    $region10: #{tpu_custom_call.1} parent=5 // pred_check_branch
      %171 = sbr.rel (%p168) target = $region12
    $region11: #{tpu_custom_call.1} parent=5 // pred_region
      %s172 = ssub.s32 %s12, 1
      // Predicated region
      $region13: #{tpu_custom_call.1} parent=11 // pred_check
        %p173 = pneg %p59
      $region14: #{tpu_custom_call.1} parent=11 // pred_check_branch
        %175 = sbr.rel (%p173) target = $region16
      $region15: #{tpu_custom_call.1} parent=11 // pred_region
        _
      $region16: #{tpu_custom_call.1} parent=11 // pred_fallthru
        _
      // Predicated region
      $region17: #{tpu_custom_call.1} parent=11 // pred_check
        %p176 = pneg %p80
      $region18: #{tpu_custom_call.1} parent=11 // pred_check_branch
        %178 = sbr.rel (%p176) target = $region20
      $region19: #{tpu_custom_call.1} parent=11 // pred_region
        _
      $region20: #{tpu_custom_call.1} parent=11 // pred_fallthru
        _
    $region12: #{tpu_custom_call.1} parent=5 // pred_fallthru
      _
    %p179 = scmp.lt.s32.totalorder %s12, 2
    // Predicated region
    $region21: #{tpu_custom_call.1} parent=5 // pred_check
      %p180 = pneg %p179
    $region22: #{tpu_custom_call.1} parent=5 // pred_check_branch
      %182 = sbr.rel (%p180) target = $region24
    $region23: #{tpu_custom_call.1} parent=5 // pred_region
      // Predicated region
      $region25: #{tpu_custom_call.1} parent=23 // pred_check
        %p183 = pneg %p32
      $region26: #{tpu_custom_call.1} parent=23 // pred_check_branch
        %185 = sbr.rel (%p183) target = $region28
      $region27: #{tpu_custom_call.1} parent=23 // pred_region
        %s186 = smul.u32 32, %s12
        %p187 = scmp.lt.s32.totalorder %s186, 63
        %s188 = scalar_select %p187, %s186, 63
        %s189 = smul.addr %s188, 4
        %s190 = scalar_lea.vmem %s0, %s189
        %s191 = smul.u32 32, %s12
      $region28: #{tpu_custom_call.1} parent=23 // pred_fallthru
        _
      // Predicated region
      $region29: #{tpu_custom_call.1} parent=23 // pred_check
        %p192 = pneg %p100
      $region30: #{tpu_custom_call.1} parent=23 // pred_check_branch
        %194 = sbr.rel (%p192) target = $region32
      $region31: #{tpu_custom_call.1} parent=23 // pred_region
        %s195 = smul.u32 32, %s12
        %p196 = scmp.lt.s32.totalorder %s195, 63
        %s197 = scalar_select %p196, %s195, 63
        %s198 = smul.addr %s197, 4
        %s199 = scalar_lea.vmem %s3, %s198
        %s200 = smul.u32 32, %s12
      $region32: #{tpu_custom_call.1} parent=23 // pred_fallthru
        _
    $region24: #{tpu_custom_call.1} parent=5 // pred_fallthru
      _
    %p201 = scmp.le.s32.totalorder 1, %s12
    %p202 = scmp.lt.s32.totalorder %s12, 3
    %p203 = pnand %p201, %p202
    %p204 = pneg %p203
    // Predicated region
    $region33: #{tpu_custom_call.1} parent=5 // pred_check
      _
    $region34: #{tpu_custom_call.1} parent=5 // pred_check_branch
      %206 = sbr.rel (%p203) target = $region36
    $region35: #{tpu_custom_call.1} parent=5 // pred_region
      %s207 = ssub.s32 %s12, 1
      %s208 = smul.u32 32, %s17
      %p209 = scmp.lt.s32.totalorder %s208, 63
      %s210 = scalar_select %p209, %s208, 63
      %s211 = smul.addr %s210, 4
      %s212 = scalar_lea.vmem %s0, %s211
      %p213 = pneg %p38
      %p214 = pneg %p35
      %p215 = pneg %p59
      %p216 = pneg %p56
      %p217 = pneg %p80
      %p218 = pneg %p77
      %s219 = smul.u32 32, %s17
      %p220 = scmp.lt.s32.totalorder %s219, 63
      %s221 = scalar_select %p220, %s219, 63
      %s222 = smul.addr %s221, 4
      %s223 = scalar_lea.vmem %s3, %s222
      %p224 = pneg %p106
      %p225 = pneg %p103
      %p226 = pneg %p132
      %p227 = pneg %p129
      %s228 = smul.u32 32, %s17
      %p229 = scmp.lt.s32.totalorder %s228, 63
      %s230 = scalar_select %p229, %s228, 63
      %s231 = smul.addr %s230, 4
      %s232 = scalar_lea.vmem %s4, %s231
      %p233 = pneg %p158
      %p234 = pneg %p155
      %s235 = smul.u32 32, %s17
      %p236 = scmp.lt.s32.totalorder %s235, 63
      %s237 = scalar_select %p236, %s235, 63
      %s238 = smul.addr %s237, 4
      %s239 = scalar_lea.vmem %s5, %s238
      %s240 = smul.u32 32, %s17
      %p241 = scmp.lt.s32.totalorder %s240, 63
      %s242 = scalar_select %p241, %s240, 63
      %s243 = smul.addr %s242, 4
      %s244 = scalar_lea.vmem %s0, %s243
      %s245 = smul.u32 32, %s17
      %s246 = smul.u32 32, %s17
      %p247 = scmp.lt.s32.totalorder %s246, 63
      %s248 = scalar_select %p247, %s246, 63
      %s249 = smul.addr %s248, 4
      %s250 = scalar_lea.vmem %s3, %s249
      %s251 = smul.u32 32, %s17
      %s252 = smul.u32 32, %s17
      %p253 = scmp.lt.s32.totalorder %s252, 63
      %s254 = scalar_select %p253, %s252, 63
      %s255 = smul.addr %s254, 4
      %s256 = scalar_lea.vmem %s4, %s255
      %s257 = smul.u32 32, %s17
      %s258 = smul.u32 32, %s17
      %p259 = scmp.lt.s32.totalorder %s258, 63
      %s260 = scalar_select %p259, %s258, 63
      %s261 = smul.addr %s260, 4
      %s262 = scalar_lea.vmem %s5, %s261
      %s263 = smul.u32 32, %s17
      %v265 = vld [vmem:[%s244] sm:$0xf]
      %v266 = vld [vmem:[%s244 + $0x4] sm:$0xf]
      %v267 = vld [vmem:[%s244 + $0x8] sm:$0xf]
      %v268 = vld [vmem:[%s244 + $0xc] sm:$0xf]
      %v269 = vld [vmem:[%s244 + $0x10] sm:$0xf]
      %v270 = vld [vmem:[%s244 + $0x14] sm:$0xf]
      %v271 = vld [vmem:[%s244 + $0x18] sm:$0xf]
      %v272 = vld [vmem:[%s244 + $0x1c] sm:$0xf]
      %v273 = vld [vmem:[%s244 + $0x20] sm:$0xf]
      %v274 = vld [vmem:[%s244 + $0x24] sm:$0xf]
      %v275 = vld [vmem:[%s244 + $0x28] sm:$0xf]
      %v276 = vld [vmem:[%s244 + $0x2c] sm:$0xf]
      %v277 = vld [vmem:[%s244 + $0x30] sm:$0xf]
      %v278 = vld [vmem:[%s244 + $0x34] sm:$0xf]
      %v279 = vld [vmem:[%s244 + $0x38] sm:$0xf]
      %v280 = vld [vmem:[%s244 + $0x3c] sm:$0xf]
      %v281 = vld [vmem:[%s244 + $0x40] sm:$0xf]
      %v282 = vld [vmem:[%s244 + $0x44] sm:$0xf]
      %v283 = vld [vmem:[%s244 + $0x48] sm:$0xf]
      %v284 = vld [vmem:[%s244 + $0x4c] sm:$0xf]
      %v285 = vld [vmem:[%s244 + $0x50] sm:$0xf]
      %v286 = vld [vmem:[%s244 + $0x54] sm:$0xf]
      %v287 = vld [vmem:[%s244 + $0x58] sm:$0xf]
      %v288 = vld [vmem:[%s244 + $0x5c] sm:$0xf]
      %v289 = vld [vmem:[%s244 + $0x60] sm:$0xf]
      %v290 = vld [vmem:[%s244 + $0x64] sm:$0xf]
      %v291 = vld [vmem:[%s244 + $0x68] sm:$0xf]
      %v292 = vld [vmem:[%s244 + $0x6c] sm:$0xf]
      %v293 = vld [vmem:[%s244 + $0x70] sm:$0xf]
      %v294 = vld [vmem:[%s244 + $0x74] sm:$0xf]
      %v295 = vld [vmem:[%s244 + $0x78] sm:$0xf]
      %v296 = vld [vmem:[%s244 + $0x7c] sm:$0xf]
      %v297 = vld [vmem:[%s1] sm:$0xf]
      %v298 = vld [vmem:[%s1 + $0x4] sm:$0xf]
      %v299 = vld [vmem:[%s1 + $0x8] sm:$0xf]
      %v300 = vld [vmem:[%s1 + $0xc] sm:$0x3]
      %v301 = vld [vmem:[%s2] sm:$0x1]
      %v303 = vlaneseq
      %v304 = vshrl.u32 %v303, 7
      %v305 = vsub.s32 0, %v304
      %v306 = vrot.slane %v301, %v305
      %v340 = vunpack.c.l.b16 %v265
      %v341 = vunpack.c.l.b16 %v266
      %v342 = vunpack.c.l.b16 %v267
      %v343 = vunpack.c.l.b16 %v268
      %v344 = vunpack.c.l.b16 %v269
      %v345 = vunpack.c.l.b16 %v270
      %v346 = vunpack.c.l.b16 %v271
      %v347 = vunpack.c.l.b16 %v272
      %v348 = vunpack.c.l.b16 %v273
      %v349 = vunpack.c.l.b16 %v274
      %v350 = vunpack.c.l.b16 %v275
      %v351 = vunpack.c.l.b16 %v276
      %v352 = vunpack.c.l.b16 %v277
      %v353 = vunpack.c.l.b16 %v278
      %v354 = vunpack.c.l.b16 %v279
      %v355 = vunpack.c.l.b16 %v280
      %v356 = vunpack.c.l.b16 %v281
      %v357 = vunpack.c.l.b16 %v282
      %v358 = vunpack.c.l.b16 %v283
      %v359 = vunpack.c.l.b16 %v284
      %v360 = vunpack.c.l.b16 %v285
      %v361 = vunpack.c.l.b16 %v286
      %v362 = vunpack.c.l.b16 %v287
      %v363 = vunpack.c.l.b16 %v288
      %v364 = vunpack.c.l.b16 %v289
      %v365 = vunpack.c.l.b16 %v290
      %v366 = vunpack.c.l.b16 %v291
      %v367 = vunpack.c.l.b16 %v292
      %v368 = vunpack.c.l.b16 %v293
      %v369 = vunpack.c.l.b16 %v294
      %v370 = vunpack.c.l.b16 %v295
      %v371 = vunpack.c.l.b16 %v296
      %v372 = vpack.c.b16 %v341, %v340
      %v373 = vpack.c.b16 %v343, %v342
      %v374 = vpack.c.b16 %v345, %v344
      %v375 = vpack.c.b16 %v347, %v346
      %v376 = vpack.c.b16 %v349, %v348
      %v377 = vpack.c.b16 %v351, %v350
      %v378 = vpack.c.b16 %v353, %v352
      %v379 = vpack.c.b16 %v355, %v354
      %v380 = vpack.c.b16 %v357, %v356
      %v381 = vpack.c.b16 %v359, %v358
      %v382 = vpack.c.b16 %v361, %v360
      %v383 = vpack.c.b16 %v363, %v362
      %v384 = vpack.c.b16 %v365, %v364
      %v385 = vpack.c.b16 %v367, %v366
      %v386 = vpack.c.b16 %v369, %v368
      %v387 = vpack.c.b16 %v371, %v370
      %v392 = vunpack.c.l.b16 %v297
      %v393 = vunpack.c.l.b16 %v298
      %v394 = vunpack.c.l.b16 %v299
      %v395 = vunpack.c.l.b16 %v300
      %v396 = vpack.c.b16 %v393, %v392
      %v397 = vpack.c.b16 %v395, %v394
      %vm399 = vcmask 220160
      %v401 = vsel %vm399, %v372, 0
      %v404 = vsel %vm399, %v373, 0
      %v407 = vsel %vm399, %v374, 0
      %v410 = vsel %vm399, %v375, 0
      %v413 = vsel %vm399, %v376, 0
      %v416 = vsel %vm399, %v377, 0
      %v419 = vsel %vm399, %v378, 0
      %v422 = vsel %vm399, %v379, 0
      %v425 = vsel %vm399, %v380, 0
      %v428 = vsel %vm399, %v381, 0
      %v431 = vsel %vm399, %v382, 0
      %v434 = vsel %vm399, %v383, 0
      %v437 = vsel %vm399, %v384, 0
      %v440 = vsel %vm399, %v385, 0
      %v443 = vsel %vm399, %v386, 0
      %v446 = vsel %vm399, %v387, 0
      %vm448 = vcmask 1044480
      %vm449 = vcmask 1045504
      %v450 = vsel %vm448, 4294967295, 65535
      %v451 = vsel %vm449, %v450, 0
      %v453 = vand.u32 %v397, %v451
      %455 = vmatprep.subr.bf16.mxu0 0
      %456 = vmatpush1.bf16.msra.mxu0 %v396
      %457 = vmatprep.subr.bf16.mxu0 0
      %458 = vmatpush1.bf16.msra.mxu0 %v453
      %459 = vmatprep.subr.bf16.mxu0 0
      %460 = vmatpush1.bf16.msra.mxu0 0
      %461 = vmatprep.subr.bf16.mxu0 0
      %462 = vmatpush1.bf16.msra.mxu0 0
      %463 = vmatprep.subr.bf16.mxu0 0
      %464 = vmatpush1.bf16.msra.mxu0 0
      %465 = vmatprep.subr.bf16.mxu0 0
      %466 = vmatpush1.bf16.msra.mxu0 0
      %467 = vmatprep.subr.bf16.mxu0 0
      %468 = vmatpush1.bf16.msra.mxu0 0
      %469 = vmatprep.subr.bf16.mxu0 0
      %470 = vmatpush1.bf16.msra.mxu0 0
      %471 = vmatprep.subr.bf16.mxu0 0
      %472 = vmatpush1.bf16.msra.mxu0 0
      %473 = vmatprep.subr.bf16.mxu0 0
      %474 = vmatpush1.bf16.msra.mxu0 0
      %475 = vmatprep.subr.bf16.mxu0 0
      %476 = vmatpush1.bf16.msra.mxu0 0
      %477 = vmatprep.subr.bf16.mxu0 0
      %478 = vmatpush1.bf16.msra.mxu0 0
      %479 = vmatprep.subr.bf16.mxu0 0
      %480 = vmatpush1.bf16.msra.mxu0 0
      %481 = vmatprep.subr.bf16.mxu0 0
      %482 = vmatpush1.bf16.msra.mxu0 0
      %483 = vmatprep.subr.bf16.mxu0 0
      %484 = vmatpush1.bf16.msra.mxu0 0
      %485 = vmatprep.subr.bf16.mxu0 0
      %486 = vmatpush1.bf16.msra.mxu0 0
      %487 = vmatprep.mubr.bf16.mxu0 0
      %488 = vmatmul.mubr.bf16.gmra.mrb[0].mxu0 %v401
      %v489 = vpop.f32.mrb[0].mxu0
      %v490 = vadd.f32 %v306, %v489
      %v491 = vpop.f32.mrb[0].mxu0
      %v492 = vpop.f32.mrb[0].mxu0
      %v493 = vadd.f32 %v306, %v492
      %v494 = vpop.f32.mrb[0].mxu0
      %495 = vmatprep.mubr.bf16.mxu0 0
      %496 = vmatmul.mubr.bf16.gmra.mrb[0].mxu0 %v404
      %v497 = vpop.f32.mrb[0].mxu0
      %v498 = vadd.f32 %v306, %v497
      %v499 = vpop.f32.mrb[0].mxu0
      %v500 = vpop.f32.mrb[0].mxu0
      %v501 = vadd.f32 %v306, %v500
      %v502 = vpop.f32.mrb[0].mxu0
      %503 = vmatprep.mubr.bf16.mxu0 0
      %504 = vmatmul.mubr.bf16.gmra.mrb[0].mxu0 %v407
      %v505 = vpop.f32.mrb[0].mxu0
      %v506 = vadd.f32 %v306, %v505
      %v507 = vpop.f32.mrb[0].mxu0
      %v508 = vpop.f32.mrb[0].mxu0
      %v509 = vadd.f32 %v306, %v508
      %v510 = vpop.f32.mrb[0].mxu0
      %511 = vmatprep.mubr.bf16.mxu0 0
      %512 = vmatmul.mubr.bf16.gmra.mrb[0].mxu0 %v410
      %v513 = vpop.f32.mrb[0].mxu0
      %v514 = vadd.f32 %v306, %v513
      %v515 = vpop.f32.mrb[0].mxu0
      %v516 = vpop.f32.mrb[0].mxu0
      %v517 = vadd.f32 %v306, %v516
      %v518 = vpop.f32.mrb[0].mxu0
      %519 = vmatprep.mubr.bf16.mxu0 0
      %520 = vmatmul.mubr.bf16.gmra.mrb[0].mxu0 %v413
      %v521 = vpop.f32.mrb[0].mxu0
      %v522 = vadd.f32 %v306, %v521
      %v523 = vpop.f32.mrb[0].mxu0
      %v524 = vpop.f32.mrb[0].mxu0
      %v525 = vadd.f32 %v306, %v524
      %v526 = vpop.f32.mrb[0].mxu0
      %527 = vmatprep.mubr.bf16.mxu0 0
      %528 = vmatmul.mubr.bf16.gmra.mrb[0].mxu0 %v416
      %v529 = vpop.f32.mrb[0].mxu0
      %v530 = vadd.f32 %v306, %v529
      %v531 = vpop.f32.mrb[0].mxu0
      %v532 = vpop.f32.mrb[0].mxu0
      %v533 = vadd.f32 %v306, %v532
      %v534 = vpop.f32.mrb[0].mxu0
      %535 = vmatprep.mubr.bf16.mxu0 0
      %536 = vmatmul.mubr.bf16.gmra.mrb[0].mxu0 %v419
      %v537 = vpop.f32.mrb[0].mxu0
      %v538 = vadd.f32 %v306, %v537
      %v539 = vpop.f32.mrb[0].mxu0
      %v540 = vpop.f32.mrb[0].mxu0
      %v541 = vadd.f32 %v306, %v540
      %v542 = vpop.f32.mrb[0].mxu0
      %543 = vmatprep.mubr.bf16.mxu0 0
      %544 = vmatmul.mubr.bf16.gmra.mrb[0].mxu0 %v422
      %v545 = vpop.f32.mrb[0].mxu0
      %v546 = vadd.f32 %v306, %v545
      %v547 = vpop.f32.mrb[0].mxu0
      %v548 = vpop.f32.mrb[0].mxu0
      %v549 = vadd.f32 %v306, %v548
      %v550 = vpop.f32.mrb[0].mxu0
      %551 = vmatprep.mubr.bf16.mxu0 0
      %552 = vmatmul.mubr.bf16.gmra.mrb[0].mxu0 %v425
      %v553 = vpop.f32.mrb[0].mxu0
      %v554 = vadd.f32 %v306, %v553
      %v555 = vpop.f32.mrb[0].mxu0
      %v556 = vpop.f32.mrb[0].mxu0
      %v557 = vadd.f32 %v306, %v556
      %v558 = vpop.f32.mrb[0].mxu0
      %559 = vmatprep.mubr.bf16.mxu0 0
      %560 = vmatmul.mubr.bf16.gmra.mrb[0].mxu0 %v428
      %v561 = vpop.f32.mrb[0].mxu0
      %v562 = vadd.f32 %v306, %v561
      %v563 = vpop.f32.mrb[0].mxu0
      %v564 = vpop.f32.mrb[0].mxu0
      %v565 = vadd.f32 %v306, %v564
      %v566 = vpop.f32.mrb[0].mxu0
      %567 = vmatprep.mubr.bf16.mxu0 0
      %568 = vmatmul.mubr.bf16.gmra.mrb[0].mxu0 %v431
      %v569 = vpop.f32.mrb[0].mxu0
      %v570 = vadd.f32 %v306, %v569
      %v571 = vpop.f32.mrb[0].mxu0
      %v572 = vpop.f32.mrb[0].mxu0
      %v573 = vadd.f32 %v306, %v572
      %v574 = vpop.f32.mrb[0].mxu0
      %575 = vmatprep.mubr.bf16.mxu0 0
      %576 = vmatmul.mubr.bf16.gmra.mrb[0].mxu0 %v434
      %v577 = vpop.f32.mrb[0].mxu0
      %v578 = vadd.f32 %v306, %v577
      %v579 = vpop.f32.mrb[0].mxu0
      %v580 = vpop.f32.mrb[0].mxu0
      %v581 = vadd.f32 %v306, %v580
      %v582 = vpop.f32.mrb[0].mxu0
      %583 = vmatprep.mubr.bf16.mxu0 0
      %584 = vmatmul.mubr.bf16.gmra.mrb[0].mxu0 %v437
      %v585 = vpop.f32.mrb[0].mxu0
      %v586 = vadd.f32 %v306, %v585
      %v587 = vpop.f32.mrb[0].mxu0
      %v588 = vpop.f32.mrb[0].mxu0
      %v589 = vadd.f32 %v306, %v588
      %v590 = vpop.f32.mrb[0].mxu0
      %591 = vmatprep.mubr.bf16.mxu0 0
      %592 = vmatmul.mubr.bf16.gmra.mrb[0].mxu0 %v440
      %v593 = vpop.f32.mrb[0].mxu0
      %v594 = vadd.f32 %v306, %v593
      %v595 = vpop.f32.mrb[0].mxu0
      %v596 = vpop.f32.mrb[0].mxu0
      %v597 = vadd.f32 %v306, %v596
      %v598 = vpop.f32.mrb[0].mxu0
      %599 = vmatprep.mubr.bf16.mxu0 0
      %600 = vmatmul.mubr.bf16.gmra.mrb[0].mxu0 %v443
      %v601 = vpop.f32.mrb[0].mxu0
      %v602 = vadd.f32 %v306, %v601
      %v603 = vpop.f32.mrb[0].mxu0
      %v604 = vpop.f32.mrb[0].mxu0
      %v605 = vadd.f32 %v306, %v604
      %v606 = vpop.f32.mrb[0].mxu0
      %607 = vmatprep.mubr.bf16.mxu0 0
      %608 = vmatmul.mubr.bf16.gmra.mrb[0].mxu0 %v446
      %v609 = vpop.f32.mrb[0].mxu0
      %v610 = vadd.f32 %v306, %v609
      %v611 = vpop.f32.mrb[0].mxu0
      %v612 = vpop.f32.mrb[0].mxu0
      %v613 = vadd.f32 %v306, %v612
      %v614 = vpop.f32.mrb[0].mxu0
      %615 = vdwg.mxu0
      %v616 = vmax.f32 %v490, 0.0
      %v617 = vmax.f32 %v493, 0.0
      %v618 = vmax.f32 %v498, 0.0
      %v619 = vmax.f32 %v501, 0.0
      %v620 = vmax.f32 %v506, 0.0
      %v621 = vmax.f32 %v509, 0.0
      %v622 = vmax.f32 %v514, 0.0
      %v623 = vmax.f32 %v517, 0.0
      %v624 = vmax.f32 %v522, 0.0
      %v625 = vmax.f32 %v525, 0.0
      %v626 = vmax.f32 %v530, 0.0
      %v627 = vmax.f32 %v533, 0.0
      %v628 = vmax.f32 %v538, 0.0
      %v629 = vmax.f32 %v541, 0.0
      %v630 = vmax.f32 %v546, 0.0
      %v631 = vmax.f32 %v549, 0.0
      %v632 = vmax.f32 %v554, 0.0
      %v633 = vmax.f32 %v557, 0.0
      %v634 = vmax.f32 %v562, 0.0
      %v635 = vmax.f32 %v565, 0.0
      %v636 = vmax.f32 %v570, 0.0
      %v637 = vmax.f32 %v573, 0.0
      %v638 = vmax.f32 %v578, 0.0
      %v639 = vmax.f32 %v581, 0.0
      %v640 = vmax.f32 %v586, 0.0
      %v641 = vmax.f32 %v589, 0.0
      %v642 = vmax.f32 %v594, 0.0
      %v643 = vmax.f32 %v597, 0.0
      %v644 = vmax.f32 %v602, 0.0
      %v645 = vmax.f32 %v605, 0.0
      %v646 = vmax.f32 %v610, 0.0
      %v647 = vmax.f32 %v613, 0.0
      %v648 = vmul.f32 %v616, %v616
      %v649 = vmul.f32 %v617, %v617
      %v650 = vmul.f32 %v618, %v618
      %v651 = vmul.f32 %v619, %v619
      %v652 = vmul.f32 %v620, %v620
      %v653 = vmul.f32 %v621, %v621
      %v654 = vmul.f32 %v622, %v622
      %v655 = vmul.f32 %v623, %v623
      %v656 = vmul.f32 %v624, %v624
      %v657 = vmul.f32 %v625, %v625
      %v658 = vmul.f32 %v626, %v626
      %v659 = vmul.f32 %v627, %v627
      %v660 = vmul.f32 %v628, %v628
      %v661 = vmul.f32 %v629, %v629
      %v662 = vmul.f32 %v630, %v630
      %v663 = vmul.f32 %v631, %v631
      %v664 = vmul.f32 %v632, %v632
      %v665 = vmul.f32 %v633, %v633
      %v666 = vmul.f32 %v634, %v634
      %v667 = vmul.f32 %v635, %v635
      %v668 = vmul.f32 %v636, %v636
      %v669 = vmul.f32 %v637, %v637
      %v670 = vmul.f32 %v638, %v638
      %v671 = vmul.f32 %v639, %v639
      %v672 = vmul.f32 %v640, %v640
      %v673 = vmul.f32 %v641, %v641
      %v674 = vmul.f32 %v642, %v642
      %v675 = vmul.f32 %v643, %v643
      %v676 = vmul.f32 %v644, %v644
      %v677 = vmul.f32 %v645, %v645
      %v678 = vmul.f32 %v646, %v646
      %v679 = vmul.f32 %v647, %v647
      %vm680 = vcmask 261120
      %v681 = vsel %vm680, %v648, 0.0
      %682 = vadd.xlane.f32.xlu0 %v681
      %v683 = vpop.xlane.xlu0 %682
      %v684 = vsel %vm680, %v649, 0.0
      %685 = vadd.xlane.f32.xlu0 %v684
      %v686 = vpop.xlane.xlu0 %685
      %v687 = vsel %vm680, %v650, 0.0
      %688 = vadd.xlane.f32.xlu0 %v687
      %v689 = vpop.xlane.xlu0 %688
      %v690 = vsel %vm680, %v651, 0.0
      %691 = vadd.xlane.f32.xlu0 %v690
      %v692 = vpop.xlane.xlu0 %691
      %v693 = vsel %vm680, %v652, 0.0
      %694 = vadd.xlane.f32.xlu0 %v693
      %v695 = vpop.xlane.xlu0 %694
      %v696 = vsel %vm680, %v653, 0.0
      %697 = vadd.xlane.f32.xlu0 %v696
      %v698 = vpop.xlane.xlu0 %697
      %v699 = vsel %vm680, %v654, 0.0
      %700 = vadd.xlane.f32.xlu0 %v699
      %v701 = vpop.xlane.xlu0 %700
      %v702 = vsel %vm680, %v655, 0.0
      %703 = vadd.xlane.f32.xlu0 %v702
      %v704 = vpop.xlane.xlu0 %703
      %v705 = vsel %vm680, %v656, 0.0
      %706 = vadd.xlane.f32.xlu0 %v705
      %v707 = vpop.xlane.xlu0 %706
      %v708 = vsel %vm680, %v657, 0.0
      %709 = vadd.xlane.f32.xlu0 %v708
      %v710 = vpop.xlane.xlu0 %709
      %v711 = vsel %vm680, %v658, 0.0
      %712 = vadd.xlane.f32.xlu0 %v711
      %v713 = vpop.xlane.xlu0 %712
      %v714 = vsel %vm680, %v659, 0.0
      %715 = vadd.xlane.f32.xlu0 %v714
      %v716 = vpop.xlane.xlu0 %715
      %v717 = vsel %vm680, %v660, 0.0
      %718 = vadd.xlane.f32.xlu0 %v717
      %v719 = vpop.xlane.xlu0 %718
      %v720 = vsel %vm680, %v661, 0.0
      %721 = vadd.xlane.f32.xlu0 %v720
      %v722 = vpop.xlane.xlu0 %721
      %v723 = vsel %vm680, %v662, 0.0
      %724 = vadd.xlane.f32.xlu0 %v723
      %v725 = vpop.xlane.xlu0 %724
      %v726 = vsel %vm680, %v663, 0.0
      %727 = vadd.xlane.f32.xlu0 %v726
      %v728 = vpop.xlane.xlu0 %727
      %v729 = vsel %vm680, %v664, 0.0
      %730 = vadd.xlane.f32.xlu0 %v729
      %v731 = vpop.xlane.xlu0 %730
      %v732 = vsel %vm680, %v665, 0.0
      %733 = vadd.xlane.f32.xlu0 %v732
      %v734 = vpop.xlane.xlu0 %733
      %v735 = vsel %vm680, %v666, 0.0
      %736 = vadd.xlane.f32.xlu0 %v735
      %v737 = vpop.xlane.xlu0 %736
      %v738 = vsel %vm680, %v667, 0.0
      %739 = vadd.xlane.f32.xlu0 %v738
      %v740 = vpop.xlane.xlu0 %739
      %v741 = vsel %vm680, %v668, 0.0
      %742 = vadd.xlane.f32.xlu0 %v741
      %v743 = vpop.xlane.xlu0 %742
      %v744 = vsel %vm680, %v669, 0.0
      %745 = vadd.xlane.f32.xlu0 %v744
      %v746 = vpop.xlane.xlu0 %745
      %v747 = vsel %vm680, %v670, 0.0
      %748 = vadd.xlane.f32.xlu0 %v747
      %v749 = vpop.xlane.xlu0 %748
      %v750 = vsel %vm680, %v671, 0.0
      %751 = vadd.xlane.f32.xlu0 %v750
      %v752 = vpop.xlane.xlu0 %751
      %v753 = vsel %vm680, %v672, 0.0
      %754 = vadd.xlane.f32.xlu0 %v753
      %v755 = vpop.xlane.xlu0 %754
      %v756 = vsel %vm680, %v673, 0.0
      %757 = vadd.xlane.f32.xlu0 %v756
      %v758 = vpop.xlane.xlu0 %757
      %v759 = vsel %vm680, %v674, 0.0
      %760 = vadd.xlane.f32.xlu0 %v759
      %v761 = vpop.xlane.xlu0 %760
      %v762 = vsel %vm680, %v675, 0.0
      %763 = vadd.xlane.f32.xlu0 %v762
      %v764 = vpop.xlane.xlu0 %763
      %v765 = vsel %vm680, %v676, 0.0
      %766 = vadd.xlane.f32.xlu0 %v765
      %v767 = vpop.xlane.xlu0 %766
      %v768 = vsel %vm680, %v677, 0.0
      %769 = vadd.xlane.f32.xlu0 %v768
      %v770 = vpop.xlane.xlu0 %769
      %v771 = vsel %vm680, %v678, 0.0
      %772 = vadd.xlane.f32.xlu0 %v771
      %v773 = vpop.xlane.xlu0 %772
      %v774 = vsel %vm680, %v679, 0.0
      %775 = vadd.xlane.f32.xlu0 %v774
      %v776 = vpop.xlane.xlu0 %775
      %v777 = vmul.f32 %v683, 0.03125
      %v778 = vmul.f32 %v686, 0.03125
      %v779 = vmul.f32 %v689, 0.03125
      %v780 = vmul.f32 %v692, 0.03125
      %v781 = vmul.f32 %v695, 0.03125
      %v782 = vmul.f32 %v698, 0.03125
      %v783 = vmul.f32 %v701, 0.03125
      %v784 = vmul.f32 %v704, 0.03125
      %v785 = vmul.f32 %v707, 0.03125
      %v786 = vmul.f32 %v710, 0.03125
      %v787 = vmul.f32 %v713, 0.03125
      %v788 = vmul.f32 %v716, 0.03125
      %v789 = vmul.f32 %v719, 0.03125
      %v790 = vmul.f32 %v722, 0.03125
      %v791 = vmul.f32 %v725, 0.03125
      %v792 = vmul.f32 %v728, 0.03125
      %v793 = vmul.f32 %v731, 0.03125
      %v794 = vmul.f32 %v734, 0.03125
      %v795 = vmul.f32 %v737, 0.03125
      %v796 = vmul.f32 %v740, 0.03125
      %v797 = vmul.f32 %v743, 0.03125
      %v798 = vmul.f32 %v746, 0.03125
      %v799 = vmul.f32 %v749, 0.03125
      %v800 = vmul.f32 %v752, 0.03125
      %v801 = vmul.f32 %v755, 0.03125
      %v802 = vmul.f32 %v758, 0.03125
      %v803 = vmul.f32 %v761, 0.03125
      %v804 = vmul.f32 %v764, 0.03125
      %v805 = vmul.f32 %v767, 0.03125
      %v806 = vmul.f32 %v770, 0.03125
      %v807 = vmul.f32 %v773, 0.03125
      %v808 = vmul.f32 %v776, 0.03125
      %v809 = vadd.f32 %v777, 1e-12
      %v810 = vadd.f32 %v778, 1e-12
      %v811 = vadd.f32 %v779, 1e-12
      %v812 = vadd.f32 %v780, 1e-12
      %v813 = vadd.f32 %v781, 1e-12
      %v814 = vadd.f32 %v782, 1e-12
      %v815 = vadd.f32 %v783, 1e-12
      %v816 = vadd.f32 %v784, 1e-12
      %v817 = vadd.f32 %v785, 1e-12
      %v818 = vadd.f32 %v786, 1e-12
      %v819 = vadd.f32 %v787, 1e-12
      %v820 = vadd.f32 %v788, 1e-12
      %v821 = vadd.f32 %v789, 1e-12
      %v822 = vadd.f32 %v790, 1e-12
      %v823 = vadd.f32 %v791, 1e-12
      %v824 = vadd.f32 %v792, 1e-12
      %v825 = vadd.f32 %v793, 1e-12
      %v826 = vadd.f32 %v794, 1e-12
      %v827 = vadd.f32 %v795, 1e-12
      %v828 = vadd.f32 %v796, 1e-12
      %v829 = vadd.f32 %v797, 1e-12
      %v830 = vadd.f32 %v798, 1e-12
      %v831 = vadd.f32 %v799, 1e-12
      %v832 = vadd.f32 %v800, 1e-12
      %v833 = vadd.f32 %v801, 1e-12
      %v834 = vadd.f32 %v802, 1e-12
      %v835 = vadd.f32 %v803, 1e-12
      %v836 = vadd.f32 %v804, 1e-12
      %v837 = vadd.f32 %v805, 1e-12
      %v838 = vadd.f32 %v806, 1e-12
      %v839 = vadd.f32 %v807, 1e-12
      %v840 = vadd.f32 %v808, 1e-12
      %v841 = vrsqrt.pop %v809
      %v842 = vrsqrt.pop %v810
      %v843 = vrsqrt.pop %v811
      %v844 = vrsqrt.pop %v812
      %v845 = vrsqrt.pop %v813
      %v846 = vrsqrt.pop %v814
      %v847 = vrsqrt.pop %v815
      %v848 = vrsqrt.pop %v816
      %v849 = vrsqrt.pop %v817
      %v850 = vrsqrt.pop %v818
      %v851 = vrsqrt.pop %v819
      %v852 = vrsqrt.pop %v820
      %v853 = vrsqrt.pop %v821
      %v854 = vrsqrt.pop %v822
      %v855 = vrsqrt.pop %v823
      %v856 = vrsqrt.pop %v824
      %v857 = vrsqrt.pop %v825
      %v858 = vrsqrt.pop %v826
      %v859 = vrsqrt.pop %v827
      %v860 = vrsqrt.pop %v828
      %v861 = vrsqrt.pop %v829
      %v862 = vrsqrt.pop %v830
      %v863 = vrsqrt.pop %v831
      %v864 = vrsqrt.pop %v832
      %v865 = vrsqrt.pop %v833
      %v866 = vrsqrt.pop %v834
      %v867 = vrsqrt.pop %v835
      %v868 = vrsqrt.pop %v836
      %v869 = vrsqrt.pop %v837
      %v870 = vrsqrt.pop %v838
      %v871 = vrsqrt.pop %v839
      %v872 = vrsqrt.pop %v840
      %v873 = vmul.f32 %v616, %v841
      %v874 = vmul.f32 %v617, %v842
      %v875 = vmul.f32 %v618, %v843
      %v876 = vmul.f32 %v619, %v844
      %v877 = vmul.f32 %v620, %v845
      %v878 = vmul.f32 %v621, %v846
      %v879 = vmul.f32 %v622, %v847
      %v880 = vmul.f32 %v623, %v848
      %v881 = vmul.f32 %v624, %v849
      %v882 = vmul.f32 %v625, %v850
      %v883 = vmul.f32 %v626, %v851
      %v884 = vmul.f32 %v627, %v852
      %v885 = vmul.f32 %v628, %v853
      %v886 = vmul.f32 %v629, %v854
      %v887 = vmul.f32 %v630, %v855
      %v888 = vmul.f32 %v631, %v856
      %v889 = vmul.f32 %v632, %v857
      %v890 = vmul.f32 %v633, %v858
      %v891 = vmul.f32 %v634, %v859
      %v892 = vmul.f32 %v635, %v860
      %v893 = vmul.f32 %v636, %v861
      %v894 = vmul.f32 %v637, %v862
      %v895 = vmul.f32 %v638, %v863
      %v896 = vmul.f32 %v639, %v864
      %v897 = vmul.f32 %v640, %v865
      %v898 = vmul.f32 %v641, %v866
      %v899 = vmul.f32 %v642, %v867
      %v900 = vmul.f32 %v643, %v868
      %v901 = vmul.f32 %v644, %v869
      %v902 = vmul.f32 %v645, %v870
      %v903 = vmul.f32 %v646, %v871
      %v904 = vmul.f32 %v647, %v872
      %v905 = vpack.c.bf16 %v874, %v873
      %v906 = vpack.c.bf16 %v876, %v875
      %v907 = vpack.c.bf16 %v878, %v877
      %v908 = vpack.c.bf16 %v880, %v879
      %v909 = vpack.c.bf16 %v882, %v881
      %v910 = vpack.c.bf16 %v884, %v883
      %v911 = vpack.c.bf16 %v886, %v885
      %v912 = vpack.c.bf16 %v888, %v887
      %v913 = vpack.c.bf16 %v890, %v889
      %v914 = vpack.c.bf16 %v892, %v891
      %v915 = vpack.c.bf16 %v894, %v893
      %v916 = vpack.c.bf16 %v896, %v895
      %v917 = vpack.c.bf16 %v898, %v897
      %v918 = vpack.c.bf16 %v900, %v899
      %v919 = vpack.c.bf16 %v902, %v901
      %v920 = vpack.c.bf16 %v904, %v903
      %v937 = vunpack.c.l.b16 %v905
      %v938 = vunpack.c.h.b16 %v905
      %v939 = vunpack.c.l.b16 %v906
      %v940 = vunpack.c.h.b16 %v906
      %v941 = vunpack.c.l.b16 %v907
      %v942 = vunpack.c.h.b16 %v907
      %v943 = vunpack.c.l.b16 %v908
      %v944 = vunpack.c.h.b16 %v908
      %v945 = vunpack.c.l.b16 %v909
      %v946 = vunpack.c.h.b16 %v909
      %v947 = vunpack.c.l.b16 %v910
      %v948 = vunpack.c.h.b16 %v910
      %v949 = vunpack.c.l.b16 %v911
      %v950 = vunpack.c.h.b16 %v911
      %v951 = vunpack.c.l.b16 %v912
      %v952 = vunpack.c.h.b16 %v912
      %v953 = vunpack.c.l.b16 %v913
      %v954 = vunpack.c.h.b16 %v913
      %v955 = vunpack.c.l.b16 %v914
      %v956 = vunpack.c.h.b16 %v914
      %v957 = vunpack.c.l.b16 %v915
      %v958 = vunpack.c.h.b16 %v915
      %v959 = vunpack.c.l.b16 %v916
      %v960 = vunpack.c.h.b16 %v916
      %v961 = vunpack.c.l.b16 %v917
      %v962 = vunpack.c.h.b16 %v917
      %v963 = vunpack.c.l.b16 %v918
      %v964 = vunpack.c.h.b16 %v918
      %v965 = vunpack.c.l.b16 %v919
      %v966 = vunpack.c.h.b16 %v919
      %v967 = vunpack.c.l.b16 %v920
      %v968 = vunpack.c.h.b16 %v920
      %v969 = vpack.c.b16 %v937, %v937
      %v970 = vpack.c.b16 %v938, %v938
      %v971 = vpack.c.b16 %v939, %v939
      %v972 = vpack.c.b16 %v940, %v940
      %v973 = vpack.c.b16 %v941, %v941
      %v974 = vpack.c.b16 %v942, %v942
      %v975 = vpack.c.b16 %v943, %v943
      %v976 = vpack.c.b16 %v944, %v944
      %v977 = vpack.c.b16 %v945, %v945
      %v978 = vpack.c.b16 %v946, %v946
      %v979 = vpack.c.b16 %v947, %v947
      %v980 = vpack.c.b16 %v948, %v948
      %v981 = vpack.c.b16 %v949, %v949
      %v982 = vpack.c.b16 %v950, %v950
      %v983 = vpack.c.b16 %v951, %v951
      %v984 = vpack.c.b16 %v952, %v952
      %v985 = vpack.c.b16 %v953, %v953
      %v986 = vpack.c.b16 %v954, %v954
      %v987 = vpack.c.b16 %v955, %v955
      %v988 = vpack.c.b16 %v956, %v956
      %v989 = vpack.c.b16 %v957, %v957
      %v990 = vpack.c.b16 %v958, %v958
      %v991 = vpack.c.b16 %v959, %v959
      %v992 = vpack.c.b16 %v960, %v960
      %v993 = vpack.c.b16 %v961, %v961
      %v994 = vpack.c.b16 %v962, %v962
      %v995 = vpack.c.b16 %v963, %v963
      %v996 = vpack.c.b16 %v964, %v964
      %v997 = vpack.c.b16 %v965, %v965
      %v998 = vpack.c.b16 %v966, %v966
      %v999 = vpack.c.b16 %v967, %v967
      %v1000 = vpack.c.b16 %v968, %v968
      %vm1033 = vcmask 257024
      %1034 = vst.msk [vmem:[%s256] sm:$0xf] %vm1033, %v969
      %1035 = vst.msk [vmem:[%s256 + $0x4] sm:$0xf] %vm1033, %v970
      %1036 = vst.msk [vmem:[%s256 + $0x8] sm:$0xf] %vm1033, %v971
      %1037 = vst.msk [vmem:[%s256 + $0xc] sm:$0xf] %vm1033, %v972
      %1038 = vst.msk [vmem:[%s256 + $0x10] sm:$0xf] %vm1033, %v973
      %1039 = vst.msk [vmem:[%s256 + $0x14] sm:$0xf] %vm1033, %v974
      %1040 = vst.msk [vmem:[%s256 + $0x18] sm:$0xf] %vm1033, %v975
      %1041 = vst.msk [vmem:[%s256 + $0x1c] sm:$0xf] %vm1033, %v976
      %1042 = vst.msk [vmem:[%s256 + $0x20] sm:$0xf] %vm1033, %v977
      %1043 = vst.msk [vmem:[%s256 + $0x24] sm:$0xf] %vm1033, %v978
      %1044 = vst.msk [vmem:[%s256 + $0x28] sm:$0xf] %vm1033, %v979
      %1045 = vst.msk [vmem:[%s256 + $0x2c] sm:$0xf] %vm1033, %v980
      %1046 = vst.msk [vmem:[%s256 + $0x30] sm:$0xf] %vm1033, %v981
      %1047 = vst.msk [vmem:[%s256 + $0x34] sm:$0xf] %vm1033, %v982
      %1048 = vst.msk [vmem:[%s256 + $0x38] sm:$0xf] %vm1033, %v983
      %1049 = vst.msk [vmem:[%s256 + $0x3c] sm:$0xf] %vm1033, %v984
      %1050 = vst.msk [vmem:[%s256 + $0x40] sm:$0xf] %vm1033, %v985
      %1051 = vst.msk [vmem:[%s256 + $0x44] sm:$0xf] %vm1033, %v986
      %1052 = vst.msk [vmem:[%s256 + $0x48] sm:$0xf] %vm1033, %v987
      %1053 = vst.msk [vmem:[%s256 + $0x4c] sm:$0xf] %vm1033, %v988
      %1054 = vst.msk [vmem:[%s256 + $0x50] sm:$0xf] %vm1033, %v989
      %1055 = vst.msk [vmem:[%s256 + $0x54] sm:$0xf] %vm1033, %v990
      %1056 = vst.msk [vmem:[%s256 + $0x58] sm:$0xf] %vm1033, %v991
      %1057 = vst.msk [vmem:[%s256 + $0x5c] sm:$0xf] %vm1033, %v992
      %1058 = vst.msk [vmem:[%s256 + $0x60] sm:$0xf] %vm1033, %v993
      %1059 = vst.msk [vmem:[%s256 + $0x64] sm:$0xf] %vm1033, %v994
      %1060 = vst.msk [vmem:[%s256 + $0x68] sm:$0xf] %vm1033, %v995
      %1061 = vst.msk [vmem:[%s256 + $0x6c] sm:$0xf] %vm1033, %v996
      %1062 = vst.msk [vmem:[%s256 + $0x70] sm:$0xf] %vm1033, %v997
      %1063 = vst.msk [vmem:[%s256 + $0x74] sm:$0xf] %vm1033, %v998
      %1064 = vst.msk [vmem:[%s256 + $0x78] sm:$0xf] %vm1033, %v999
      %1065 = vst.msk [vmem:[%s256 + $0x7c] sm:$0xf] %vm1033, %v1000
      %v1066 = vld [vmem:[%s250] sm:$0xf]
      %v1067 = vld [vmem:[%s250 + $0x4] sm:$0xf]
      %v1068 = vld [vmem:[%s250 + $0x8] sm:$0xf]
      %v1069 = vld [vmem:[%s250 + $0xc] sm:$0xf]
      %v1070 = vld [vmem:[%s250 + $0x10] sm:$0xf]
      %v1071 = vld [vmem:[%s250 + $0x14] sm:$0xf]
      %v1072 = vld [vmem:[%s250 + $0x18] sm:$0xf]
      %v1073 = vld [vmem:[%s250 + $0x1c] sm:$0xf]
      %v1074 = vld [vmem:[%s250 + $0x20] sm:$0xf]
      %v1075 = vld [vmem:[%s250 + $0x24] sm:$0xf]
      %v1076 = vld [vmem:[%s250 + $0x28] sm:$0xf]
      %v1077 = vld [vmem:[%s250 + $0x2c] sm:$0xf]
      %v1078 = vld [vmem:[%s250 + $0x30] sm:$0xf]
      %v1079 = vld [vmem:[%s250 + $0x34] sm:$0xf]
      %v1080 = vld [vmem:[%s250 + $0x38] sm:$0xf]
      %v1081 = vld [vmem:[%s250 + $0x3c] sm:$0xf]
      %v1082 = vld [vmem:[%s250 + $0x40] sm:$0xf]
      %v1083 = vld [vmem:[%s250 + $0x44] sm:$0xf]
      %v1084 = vld [vmem:[%s250 + $0x48] sm:$0xf]
      %v1085 = vld [vmem:[%s250 + $0x4c] sm:$0xf]
      %v1086 = vld [vmem:[%s250 + $0x50] sm:$0xf]
      %v1087 = vld [vmem:[%s250 + $0x54] sm:$0xf]
      %v1088 = vld [vmem:[%s250 + $0x58] sm:$0xf]
      %v1089 = vld [vmem:[%s250 + $0x5c] sm:$0xf]
      %v1090 = vld [vmem:[%s250 + $0x60] sm:$0xf]
      %v1091 = vld [vmem:[%s250 + $0x64] sm:$0xf]
      %v1092 = vld [vmem:[%s250 + $0x68] sm:$0xf]
      %v1093 = vld [vmem:[%s250 + $0x6c] sm:$0xf]
      %v1094 = vld [vmem:[%s250 + $0x70] sm:$0xf]
      %v1095 = vld [vmem:[%s250 + $0x74] sm:$0xf]
      %v1096 = vld [vmem:[%s250 + $0x78] sm:$0xf]
      %v1097 = vld [vmem:[%s250 + $0x7c] sm:$0xf]
      %v1098 = vunpack.c.l.bf16 %v1066
      %v1099 = vunpack.c.l.bf16 %v1067
      %v1100 = vunpack.c.l.bf16 %v1068
      %v1101 = vunpack.c.l.bf16 %v1069
      %v1102 = vunpack.c.l.bf16 %v1070
      %v1103 = vunpack.c.l.bf16 %v1071
      %v1104 = vunpack.c.l.bf16 %v1072
      %v1105 = vunpack.c.l.bf16 %v1073
      %v1106 = vunpack.c.l.bf16 %v1074
      %v1107 = vunpack.c.l.bf16 %v1075
      %v1108 = vunpack.c.l.bf16 %v1076
      %v1109 = vunpack.c.l.bf16 %v1077
      %v1110 = vunpack.c.l.bf16 %v1078
      %v1111 = vunpack.c.l.bf16 %v1079
      %v1112 = vunpack.c.l.bf16 %v1080
      %v1113 = vunpack.c.l.bf16 %v1081
      %v1114 = vunpack.c.l.bf16 %v1082
      %v1115 = vunpack.c.l.bf16 %v1083
      %v1116 = vunpack.c.l.bf16 %v1084
      %v1117 = vunpack.c.l.bf16 %v1085
      %v1118 = vunpack.c.l.bf16 %v1086
      %v1119 = vunpack.c.l.bf16 %v1087
      %v1120 = vunpack.c.l.bf16 %v1088
      %v1121 = vunpack.c.l.bf16 %v1089
      %v1122 = vunpack.c.l.bf16 %v1090
      %v1123 = vunpack.c.l.bf16 %v1091
      %v1124 = vunpack.c.l.bf16 %v1092
      %v1125 = vunpack.c.l.bf16 %v1093
      %v1126 = vunpack.c.l.bf16 %v1094
      %v1127 = vunpack.c.l.bf16 %v1095
      %v1128 = vunpack.c.l.bf16 %v1096
      %v1129 = vunpack.c.l.bf16 %v1097
      %v1130 = vmul.f32 %v1098, 0.1
      %v1131 = vmul.f32 %v1099, 0.1
      %v1132 = vmul.f32 %v1100, 0.1
      %v1133 = vmul.f32 %v1101, 0.1
      %v1134 = vmul.f32 %v1102, 0.1
      %v1135 = vmul.f32 %v1103, 0.1
      %v1136 = vmul.f32 %v1104, 0.1
      %v1137 = vmul.f32 %v1105, 0.1
      %v1138 = vmul.f32 %v1106, 0.1
      %v1139 = vmul.f32 %v1107, 0.1
      %v1140 = vmul.f32 %v1108, 0.1
      %v1141 = vmul.f32 %v1109, 0.1
      %v1142 = vmul.f32 %v1110, 0.1
      %v1143 = vmul.f32 %v1111, 0.1
      %v1144 = vmul.f32 %v1112, 0.1
      %v1145 = vmul.f32 %v1113, 0.1
      %v1146 = vmul.f32 %v1114, 0.1
      %v1147 = vmul.f32 %v1115, 0.1
      %v1148 = vmul.f32 %v1116, 0.1
      %v1149 = vmul.f32 %v1117, 0.1
      %v1150 = vmul.f32 %v1118, 0.1
      %v1151 = vmul.f32 %v1119, 0.1
      %v1152 = vmul.f32 %v1120, 0.1
      %v1153 = vmul.f32 %v1121, 0.1
      %v1154 = vmul.f32 %v1122, 0.1
      %v1155 = vmul.f32 %v1123, 0.1
      %v1156 = vmul.f32 %v1124, 0.1
      %v1157 = vmul.f32 %v1125, 0.1
      %v1158 = vmul.f32 %v1126, 0.1
      %v1159 = vmul.f32 %v1127, 0.1
      %v1160 = vmul.f32 %v1128, 0.1
      %v1161 = vmul.f32 %v1129, 0.1
      %v1162 = vadd.f32 %v873, %v1130
      %v1163 = vadd.f32 %v874, %v1131
      %v1164 = vadd.f32 %v875, %v1132
      %v1165 = vadd.f32 %v876, %v1133
      %v1166 = vadd.f32 %v877, %v1134
      %v1167 = vadd.f32 %v878, %v1135
      %v1168 = vadd.f32 %v879, %v1136
      %v1169 = vadd.f32 %v880, %v1137
      %v1170 = vadd.f32 %v881, %v1138
      %v1171 = vadd.f32 %v882, %v1139
      %v1172 = vadd.f32 %v883, %v1140
      %v1173 = vadd.f32 %v884, %v1141
      %v1174 = vadd.f32 %v885, %v1142
      %v1175 = vadd.f32 %v886, %v1143
      %v1176 = vadd.f32 %v887, %v1144
      %v1177 = vadd.f32 %v888, %v1145
      %v1178 = vadd.f32 %v889, %v1146
      %v1179 = vadd.f32 %v890, %v1147
      %v1180 = vadd.f32 %v891, %v1148
      %v1181 = vadd.f32 %v892, %v1149
      %v1182 = vadd.f32 %v893, %v1150
      %v1183 = vadd.f32 %v894, %v1151
      %v1184 = vadd.f32 %v895, %v1152
      %v1185 = vadd.f32 %v896, %v1153
      %v1186 = vadd.f32 %v897, %v1154
      %v1187 = vadd.f32 %v898, %v1155
      %v1188 = vadd.f32 %v899, %v1156
      %v1189 = vadd.f32 %v900, %v1157
      %v1190 = vadd.f32 %v901, %v1158
      %v1191 = vadd.f32 %v902, %v1159
      %v1192 = vadd.f32 %v903, %v1160
      %v1193 = vadd.f32 %v904, %v1161
      %v1194 = vpack.c.bf16 %v1163, %v1162
      %v1195 = vpack.c.bf16 %v1165, %v1164
      %v1196 = vpack.c.bf16 %v1167, %v1166
      %v1197 = vpack.c.bf16 %v1169, %v1168
      %v1198 = vpack.c.bf16 %v1171, %v1170
      %v1199 = vpack.c.bf16 %v1173, %v1172
      %v1200 = vpack.c.bf16 %v1175, %v1174
      %v1201 = vpack.c.bf16 %v1177, %v1176
      %v1202 = vpack.c.bf16 %v1179, %v1178
      %v1203 = vpack.c.bf16 %v1181, %v1180
      %v1204 = vpack.c.bf16 %v1183, %v1182
      %v1205 = vpack.c.bf16 %v1185, %v1184
      %v1206 = vpack.c.bf16 %v1187, %v1186
      %v1207 = vpack.c.bf16 %v1189, %v1188
      %v1208 = vpack.c.bf16 %v1191, %v1190
      %v1209 = vpack.c.bf16 %v1193, %v1192
      %v1226 = vunpack.c.l.b16 %v1194
      %v1227 = vunpack.c.h.b16 %v1194
      %v1228 = vunpack.c.l.b16 %v1195
      %v1229 = vunpack.c.h.b16 %v1195
      %v1230 = vunpack.c.l.b16 %v1196
      %v1231 = vunpack.c.h.b16 %v1196
      %v1232 = vunpack.c.l.b16 %v1197
      %v1233 = vunpack.c.h.b16 %v1197
      %v1234 = vunpack.c.l.b16 %v1198
      %v1235 = vunpack.c.h.b16 %v1198
      %v1236 = vunpack.c.l.b16 %v1199
      %v1237 = vunpack.c.h.b16 %v1199
      %v1238 = vunpack.c.l.b16 %v1200
      %v1239 = vunpack.c.h.b16 %v1200
      %v1240 = vunpack.c.l.b16 %v1201
      %v1241 = vunpack.c.h.b16 %v1201
      %v1242 = vunpack.c.l.b16 %v1202
      %v1243 = vunpack.c.h.b16 %v1202
      %v1244 = vunpack.c.l.b16 %v1203
      %v1245 = vunpack.c.h.b16 %v1203
      %v1246 = vunpack.c.l.b16 %v1204
      %v1247 = vunpack.c.h.b16 %v1204
      %v1248 = vunpack.c.l.b16 %v1205
      %v1249 = vunpack.c.h.b16 %v1205
      %v1250 = vunpack.c.l.b16 %v1206
      %v1251 = vunpack.c.h.b16 %v1206
      %v1252 = vunpack.c.l.b16 %v1207
      %v1253 = vunpack.c.h.b16 %v1207
      %v1254 = vunpack.c.l.b16 %v1208
      %v1255 = vunpack.c.h.b16 %v1208
      %v1256 = vunpack.c.l.b16 %v1209
      %v1257 = vunpack.c.h.b16 %v1209
      %v1258 = vpack.c.b16 %v1226, %v1226
      %v1259 = vpack.c.b16 %v1227, %v1227
      %v1260 = vpack.c.b16 %v1228, %v1228
      %v1261 = vpack.c.b16 %v1229, %v1229
      %v1262 = vpack.c.b16 %v1230, %v1230
      %v1263 = vpack.c.b16 %v1231, %v1231
      %v1264 = vpack.c.b16 %v1232, %v1232
      %v1265 = vpack.c.b16 %v1233, %v1233
      %v1266 = vpack.c.b16 %v1234, %v1234
      %v1267 = vpack.c.b16 %v1235, %v1235
      %v1268 = vpack.c.b16 %v1236, %v1236
      %v1269 = vpack.c.b16 %v1237, %v1237
      %v1270 = vpack.c.b16 %v1238, %v1238
      %v1271 = vpack.c.b16 %v1239, %v1239
      %v1272 = vpack.c.b16 %v1240, %v1240
      %v1273 = vpack.c.b16 %v1241, %v1241
      %v1274 = vpack.c.b16 %v1242, %v1242
      %v1275 = vpack.c.b16 %v1243, %v1243
      %v1276 = vpack.c.b16 %v1244, %v1244
      %v1277 = vpack.c.b16 %v1245, %v1245
      %v1278 = vpack.c.b16 %v1246, %v1246
      %v1279 = vpack.c.b16 %v1247, %v1247
      %v1280 = vpack.c.b16 %v1248, %v1248
      %v1281 = vpack.c.b16 %v1249, %v1249
      %v1282 = vpack.c.b16 %v1250, %v1250
      %v1283 = vpack.c.b16 %v1251, %v1251
      %v1284 = vpack.c.b16 %v1252, %v1252
      %v1285 = vpack.c.b16 %v1253, %v1253
      %v1286 = vpack.c.b16 %v1254, %v1254
      %v1287 = vpack.c.b16 %v1255, %v1255
      %v1288 = vpack.c.b16 %v1256, %v1256
      %v1289 = vpack.c.b16 %v1257, %v1257
      %1322 = vst.msk [vmem:[%s262] sm:$0xf] %vm1033, %v1258
      %1323 = vst.msk [vmem:[%s262 + $0x4] sm:$0xf] %vm1033, %v1259
      %1324 = vst.msk [vmem:[%s262 + $0x8] sm:$0xf] %vm1033, %v1260
      %1325 = vst.msk [vmem:[%s262 + $0xc] sm:$0xf] %vm1033, %v1261
      %1326 = vst.msk [vmem:[%s262 + $0x10] sm:$0xf] %vm1033, %v1262
      %1327 = vst.msk [vmem:[%s262 + $0x14] sm:$0xf] %vm1033, %v1263
      %1328 = vst.msk [vmem:[%s262 + $0x18] sm:$0xf] %vm1033, %v1264
      %1329 = vst.msk [vmem:[%s262 + $0x1c] sm:$0xf] %vm1033, %v1265
      %1330 = vst.msk [vmem:[%s262 + $0x20] sm:$0xf] %vm1033, %v1266
      %1331 = vst.msk [vmem:[%s262 + $0x24] sm:$0xf] %vm1033, %v1267
      %1332 = vst.msk [vmem:[%s262 + $0x28] sm:$0xf] %vm1033, %v1268
      %1333 = vst.msk [vmem:[%s262 + $0x2c] sm:$0xf] %vm1033, %v1269
      %1334 = vst.msk [vmem:[%s262 + $0x30] sm:$0xf] %vm1033, %v1270
      %1335 = vst.msk [vmem:[%s262 + $0x34] sm:$0xf] %vm1033, %v1271
      %1336 = vst.msk [vmem:[%s262 + $0x38] sm:$0xf] %vm1033, %v1272
      %1337 = vst.msk [vmem:[%s262 + $0x3c] sm:$0xf] %vm1033, %v1273
      %1338 = vst.msk [vmem:[%s262 + $0x40] sm:$0xf] %vm1033, %v1274
      %1339 = vst.msk [vmem:[%s262 + $0x44] sm:$0xf] %vm1033, %v1275
      %1340 = vst.msk [vmem:[%s262 + $0x48] sm:$0xf] %vm1033, %v1276
      %1341 = vst.msk [vmem:[%s262 + $0x4c] sm:$0xf] %vm1033, %v1277
      %1342 = vst.msk [vmem:[%s262 + $0x50] sm:$0xf] %vm1033, %v1278
      %1343 = vst.msk [vmem:[%s262 + $0x54] sm:$0xf] %vm1033, %v1279
      %1344 = vst.msk [vmem:[%s262 + $0x58] sm:$0xf] %vm1033, %v1280
      %1345 = vst.msk [vmem:[%s262 + $0x5c] sm:$0xf] %vm1033, %v1281
      %1346 = vst.msk [vmem:[%s262 + $0x60] sm:$0xf] %vm1033, %v1282
      %1347 = vst.msk [vmem:[%s262 + $0x64] sm:$0xf] %vm1033, %v1283
      %1348 = vst.msk [vmem:[%s262 + $0x68] sm:$0xf] %vm1033, %v1284
      %1349 = vst.msk [vmem:[%s262 + $0x6c] sm:$0xf] %vm1033, %v1285
      %1350 = vst.msk [vmem:[%s262 + $0x70] sm:$0xf] %vm1033, %v1286
      %1351 = vst.msk [vmem:[%s262 + $0x74] sm:$0xf] %vm1033, %v1287
      %1352 = vst.msk [vmem:[%s262 + $0x78] sm:$0xf] %vm1033, %v1288
      %1353 = vst.msk [vmem:[%s262 + $0x7c] sm:$0xf] %vm1033, %v1289
      %s1354 = smul.u32 32, %s17
      %p1355 = scmp.lt.s32.totalorder %s1354, 63
      %s1356 = scalar_select %p1355, %s1354, 63
      %s1357 = smul.addr %s1356, 4
      %s1358 = scalar_lea.vmem %s4, %s1357
      %s1359 = smul.u32 32, %s17
      %p1360 = scmp.lt.s32.totalorder %s1359, 63
      %s1361 = scalar_select %p1360, %s1359, 63
      %s1362 = smul.addr %s1361, 4
      %s1363 = scalar_lea.vmem %s5, %s1362
      // Predicated region
      $region37: #{tpu_custom_call.1} parent=35 // pred_check
        %p1364 = pneg %p129
      $region38: #{tpu_custom_call.1} parent=35 // pred_check_branch
        %1366 = sbr.rel (%p1364) target = $region40
      $region39: #{tpu_custom_call.1} parent=35 // pred_region
        %s1367 = smul.u32 32, %s17
      $region40: #{tpu_custom_call.1} parent=35 // pred_fallthru
        _
      // Predicated region
      $region41: #{tpu_custom_call.1} parent=35 // pred_check
        %p1368 = pneg %p155
      $region42: #{tpu_custom_call.1} parent=35 // pred_check_branch
        %1370 = sbr.rel (%p1368) target = $region44
      $region43: #{tpu_custom_call.1} parent=35 // pred_region
        %s1371 = smul.u32 32, %s17
      $region44: #{tpu_custom_call.1} parent=35 // pred_fallthru
        _
    $region36: #{tpu_custom_call.1} parent=5 // pred_fallthru
      _
    %p1372 = scmp.le.s32.totalorder 2, %s12
    // Predicated region
    $region45: #{tpu_custom_call.1} parent=5 // pred_check
      %p1373 = pneg %p1372
    $region46: #{tpu_custom_call.1} parent=5 // pred_check_branch
      %1375 = sbr.rel (%p1373) target = $region48
    $region47: #{tpu_custom_call.1} parent=5 // pred_region
      %s1376 = ssub.s32 %s12, 2
      // Predicated region
      $region49: #{tpu_custom_call.1} parent=47 // pred_check
        %p1377 = pneg %p135
      $region50: #{tpu_custom_call.1} parent=47 // pred_check_branch
        %1379 = sbr.rel (%p1377) target = $region52
      $region51: #{tpu_custom_call.1} parent=47 // pred_region
        %s1380 = smul.u32 32, %s18
        %p1381 = scmp.lt.s32.totalorder %s1380, 63
        %s1382 = scalar_select %p1381, %s1380, 63
        %s1383 = smul.addr %s1382, 4
        %s1384 = scalar_lea.vmem %s4, %s1383
      $region52: #{tpu_custom_call.1} parent=47 // pred_fallthru
        _
      // Predicated region
      $region53: #{tpu_custom_call.1} parent=47 // pred_check
        %p1385 = pneg %p161
      $region54: #{tpu_custom_call.1} parent=47 // pred_check_branch
        %1387 = sbr.rel (%p1385) target = $region56
      $region55: #{tpu_custom_call.1} parent=47 // pred_region
        %s1388 = smul.u32 32, %s18
        %p1389 = scmp.lt.s32.totalorder %s1388, 63
        %s1390 = scalar_select %p1389, %s1388, 63
        %s1391 = smul.addr %s1390, 4
        %s1392 = scalar_lea.vmem %s5, %s1391
      $region56: #{tpu_custom_call.1} parent=47 // pred_fallthru
        _
    $region48: #{tpu_custom_call.1} parent=5 // pred_fallthru
      _
  $region6: #{tpu_custom_call.1} parent=0 // loop_footer
    %s16 = sadd.s32 1, %s12
  $region7: #{tpu_custom_call.1} parent=0 // loop_footer_branch
    %11 = sbr.rel target = $region3
  $region8: #{tpu_custom_call.1} parent=0 // loop_exit
    _

</llo_original>
